<compile_context>
chip_gen: v7x
topology: tpu7x:2x2x1
jax: 0.10.0
libtpu: 0.0.40
codegen_flags: <defaults>
</compile_context>

<pallas_src>
import jax
import jax.numpy as jnp
from jax import lax
from jax.experimental import pallas as pl
from jax.experimental.pallas import tpu as pltpu

DIM = 18
H1 = 128
H2 = 64
OUT = 1


def _round_up(n, m):
    return ((n + m - 1) // m) * m


def mlp_kernel(x_ref, w1_ref, b1_ref, w2_ref, b2_ref, w3_ref, b3_ref, o_ref):
    # x arrives batch-major (tb, DIM) straight from HBM (no wrapper transpose
    # or pad pass).  Cast to bf16 on the VPU and contract its last dim against
    # w1's last dim -> feature-major (H1, tb); the implied transpose of the
    # (tb, 18) tile runs on the XLU and hides under the MXU work.
    x = x_ref[...].astype(jnp.bfloat16)                          # (tb, DIM) bf16

    h = lax.dot_general(
        w1_ref[...], x,
        dimension_numbers=(((1,), (1,)), ((), ())),
        preferred_element_type=jnp.float32)                      # (H1, tb) f32
    h = jnp.maximum(h + b1_ref[...], 0.0)                        # (H1,1) bias bcast over lanes

    h = jnp.dot(w2_ref[...], h.astype(jnp.bfloat16),
                preferred_element_type=jnp.float32)              # (H2, tb) f32
    h = jnp.maximum(h + b2_ref[...], 0.0)

    # Layer 3 (out_features = 1): VPU multiply + sublane reduce (XLU) instead
    # of an N=1 MXU matmul.  Lane-dense (1, tb) result -> unmasked stores.
    y = jnp.sum(h * w3_ref[...], axis=0, keepdims=True) + b3_ref[0, 0]
    o_ref[...] = y.astype(o_ref.dtype)


def mlp_forward(x, params, *, tb=4096):
    """x: (B, DIM) float32.  params in PyTorch orientation:
       w1 (128,18), b1 (128,), w2 (64,128), b2 (64,), w3 (1,64), b3 (1,).
       Returns (B, 1) float32."""
    B, dim = x.shape
    assert dim == DIM

    # --- batch-tile selection -------------------------------------------
    #  * lane-aligned (multiple of 128) so the (1, tb) output row stores with
    #    full-width unmasked vst's,
    #  * large (default 4096) to amortize the per-grid-step pipeline overhead,
    #  * capped at ~ceil(B/2) so the "parallel" grid axis has >=2 steps and
    #    both v7x TensorCores get work,
    #  * collapsed to exactly B when one tile covers the whole batch (block
    #    dims == array dims -> no padded / overhanging block needed).
    tb = _round_up(max(tb, 128), 128)
    tb = min(tb, max(128, _round_up(pl.cdiv(B, 2), 128)))
    if tb >= B:
        tb = B
    grid = (pl.cdiv(B, tb),)

    # Weights stay resident in VMEM for every batch tile.  Matmul operands in
    # bf16 (MXU), biases / layer-3 epilogue in f32, scalar b3 in SMEM.
    w1 = params["w1"].astype(jnp.bfloat16)                  # (H1, DIM)
    w2 = params["w2"].astype(jnp.bfloat16)                  # (H2, H1)
    b1 = params["b1"].reshape(H1, 1).astype(jnp.float32)    # (H1, 1)
    b2 = params["b2"].reshape(H2, 1).astype(jnp.float32)    # (H2, 1)
    w3 = params["w3"].reshape(H2, 1).astype(jnp.float32)    # (H2, 1) == w3_pt.T
    b3 = params["b3"].reshape(1, 1).astype(jnp.float32)     # (1, 1) SMEM scalar

    flops = 2 * B * (DIM * H1 + H1 * H2 + H2)
    bytes_accessed = (B * DIM * 4 + B * 4
                      + H1 * DIM * 2 + H2 * H1 * 2
                      + (H1 + H2 + H2 + 1) * 4)
    cost = pl.CostEstimate(flops=flops, transcendentals=0,
                           bytes_accessed=bytes_accessed)

    out = pl.pallas_call(
        mlp_kernel,
        out_shape=jax.ShapeDtypeStruct((1, B), jnp.float32),
        grid_spec=pltpu.PrefetchScalarGridSpec(
            num_scalar_prefetch=0,
            grid=grid,
            in_specs=[
                pl.BlockSpec((tb, DIM), lambda i: (i, 0)),      # x tile (batch-major)
                pl.BlockSpec((H1, DIM), lambda i: (0, 0)),      # w1 (resident, bf16)
                pl.BlockSpec((H1, 1), lambda i: (0, 0)),        # b1 column (f32)
                pl.BlockSpec((H2, H1), lambda i: (0, 0)),       # w2 (resident, bf16)
                pl.BlockSpec((H2, 1), lambda i: (0, 0)),        # b2 column (f32)
                pl.BlockSpec((H2, 1), lambda i: (0, 0)),        # w3 column (f32)
                pl.BlockSpec(memory_space=pltpu.MemorySpace.SMEM),  # b3 scalar
            ],
            out_specs=pl.BlockSpec((1, tb), lambda i: (0, i)),  # lane-dense output row
        ),
        compiler_params=pltpu.CompilerParams(
            dimension_semantics=("parallel",),        # batch tiles shard across TCs (v7x)
            vmem_limit_bytes=32 * 1024 * 1024,        # covers tb up to ~8192, incl. v5e
        ),
        cost_estimate=cost,
    )(x, w1, b1, w2, b2, w3, b3)

    return out[0].reshape(B, OUT)


def init_params(key):
    """Deterministic init (Kaiming-uniform-ish, PyTorch nn.Linear orientation)."""
    k1, k2, k3, k4, k5, k6 = jax.random.split(key, 6)

    def uniform(k, shape, fan_in):
        bound = 1.0 / jnp.sqrt(fan_in)
        return jax.random.uniform(k, shape, jnp.float32, -bound, bound)

    return {
        "w1": uniform(k1, (H1, DIM), DIM),
        "b1": uniform(k2, (H1,), DIM),
        "w2": uniform(k3, (H2, H1), H1),
        "b2": uniform(k4, (H2,), H1),
        "w3": uniform(k5, (OUT, H2), H2),
        "b3": uniform(k6, (OUT,), H2),
    }


def reference_forward_f32(x, params):
    h = jnp.maximum(x @ params["w1"].T + params["b1"], 0.0)
    h = jnp.maximum(h @ params["w2"].T + params["b2"], 0.0)
    return h @ params["w3"].T + params["b3"]


def reference_forward_matched(x, params):
    """Same math with the kernel's precision scheme (bf16 matmul operands,
    f32 accumulation, f32 epilogue) for a tight numerical comparison."""
    w1 = params["w1"].astype(jnp.bfloat16)
    w2 = params["w2"].astype(jnp.bfloat16)
    h = jnp.dot(x.astype(jnp.bfloat16), w1.T,
                preferred_element_type=jnp.float32) + params["b1"]
    h = jnp.maximum(h, 0.0)
    h = jnp.dot(h.astype(jnp.bfloat16), w2.T,
                preferred_element_type=jnp.float32) + params["b2"]
    h = jnp.maximum(h, 0.0)
    return h @ params["w3"].T + params["b3"]


if __name__ == "__main__":
    key = jax.random.PRNGKey(0)
    kx, kp = jax.random.split(key)

    # Deliberately not a tile multiple: exercises the multi-tile path and the
    # clipped (ragged) last block on both input and output.
    B = 300
    x = jax.random.normal(kx, (B, DIM), dtype=jnp.float32)
    params = init_params(kp)

    fwd = jax.jit(mlp_forward)
    y = jax.block_until_ready(fwd(x, params))

    assert y.shape == (B, OUT)

    y_matched = reference_forward_matched(x, params)
    y_f32 = reference_forward_f32(x, params)
    assert jnp.allclose(y, y_matched, atol=2e-3, rtol=2e-3), \
        "mismatch vs precision-matched JAX reference"
    assert jnp.allclose(y, y_f32, atol=3e-2, rtol=3e-2), \
        "mismatch vs full-f32 JAX reference"

    print("KERNEL_OK")
</pallas_src>

<mosaic_0001>
module attributes {stable_mosaic.version = 11 : i64} {
  func.func @mlp_kernel(%arg0: i32, %arg1: memref<256x18xf32, #tpu.memory_space<vmem>>, %arg2: memref<128x18xbf16, #tpu.memory_space<vmem>>, %arg3: memref<128x1xf32, #tpu.memory_space<vmem>>, %arg4: memref<64x128xbf16, #tpu.memory_space<vmem>>, %arg5: memref<64x1xf32, #tpu.memory_space<vmem>>, %arg6: memref<64x1xf32, #tpu.memory_space<vmem>>, %arg7: memref<1x1xf32, #tpu.memory_space<smem>>, %arg8: memref<1x256xf32, #tpu.memory_space<vmem>>) attributes {dimension_semantics = [#tpu.dimension_semantics<parallel>], iteration_bounds = array<i64: 2>, scalar_prefetch = 0 : i64, scratch_operands = 0 : i64, tpu.core_type = #tpu.core_type<tc>, window_params = [{transform_indices = @transform_0, window_bounds = array<i64: 256, 18>}, {pipeline_mode = #tpu.pipeline_mode<synchronous>, transform_indices = @transform_1, window_bounds = array<i64: 128, 18>}, {pipeline_mode = #tpu.pipeline_mode<synchronous>, transform_indices = @transform_2, window_bounds = array<i64: 128, 1>}, {pipeline_mode = #tpu.pipeline_mode<synchronous>, transform_indices = @transform_3, window_bounds = array<i64: 64, 128>}, {pipeline_mode = #tpu.pipeline_mode<synchronous>, transform_indices = @transform_4, window_bounds = array<i64: 64, 1>}, {pipeline_mode = #tpu.pipeline_mode<synchronous>, transform_indices = @transform_5, window_bounds = array<i64: 64, 1>}, {transform_indices = @transform_6, window_bounds = array<i64: 1, 1>}, {transform_indices = @transform_7, window_bounds = array<i64: 1, 256>}]} {
    %c0 = arith.constant 0 : index
    %c0_0 = arith.constant 0 : index
    %0 = vector.load %arg1[%c0, %c0_0] : memref<256x18xf32, #tpu.memory_space<vmem>>, vector<256x18xf32>
    %1 = arith.truncf %0 : vector<256x18xf32> to vector<256x18xbf16>
    %c0_1 = arith.constant 0 : index
    %c0_2 = arith.constant 0 : index
    %2 = vector.load %arg2[%c0_1, %c0_2] : memref<128x18xbf16, #tpu.memory_space<vmem>>, vector<128x18xbf16>
    %cst = arith.constant dense<0.000000e+00> : vector<128x256xf32>
    %3 = tpu.matmul %2, %1, %cst {dimension_numbers = #tpu.dot_dimension_numbers<[1], [1], [0], [0], [0, 0, 1, 0], [], []>} : vector<128x18xbf16>, vector<256x18xbf16>, vector<128x256xf32> -> vector<128x256xf32>
    %c0_3 = arith.constant 0 : index
    %c0_4 = arith.constant 0 : index
    %4 = vector.load %arg3[%c0_3, %c0_4] : memref<128x1xf32, #tpu.memory_space<vmem>>, vector<128x1xf32>
    %5 = vector.broadcast %4 : vector<128x1xf32> to vector<128x256xf32>
    %6 = arith.addf %3, %5 : vector<128x256xf32>
    %cst_5 = arith.constant 0.000000e+00 : f32
    %7 = vector.broadcast %cst_5 : f32 to vector<128x256xf32>
    %8 = arith.maximumf %6, %7 : vector<128x256xf32>
    %c0_6 = arith.constant 0 : index
    %c0_7 = arith.constant 0 : index
    %9 = vector.load %arg4[%c0_6, %c0_7] : memref<64x128xbf16, #tpu.memory_space<vmem>>, vector<64x128xbf16>
    %10 = arith.truncf %8 : vector<128x256xf32> to vector<128x256xbf16>
    %cst_8 = arith.constant dense<0.000000e+00> : vector<64x256xf32>
    %11 = tpu.matmul %9, %10, %cst_8 {dimension_numbers = #tpu.dot_dimension_numbers<[1], [0], [0], [1], [0, 0, 1, 1], [], []>} : vector<64x128xbf16>, vector<128x256xbf16>, vector<64x256xf32> -> vector<64x256xf32>
    %c0_9 = arith.constant 0 : index
    %c0_10 = arith.constant 0 : index
    %12 = vector.load %arg5[%c0_9, %c0_10] : memref<64x1xf32, #tpu.memory_space<vmem>>, vector<64x1xf32>
    %13 = vector.broadcast %12 : vector<64x1xf32> to vector<64x256xf32>
    %14 = arith.addf %11, %13 : vector<64x256xf32>
    %cst_11 = arith.constant 0.000000e+00 : f32
    %15 = vector.broadcast %cst_11 : f32 to vector<64x256xf32>
    %16 = arith.maximumf %14, %15 : vector<64x256xf32>
    %c0_12 = arith.constant 0 : index
    %c0_13 = arith.constant 0 : index
    %17 = vector.load %arg6[%c0_12, %c0_13] : memref<64x1xf32, #tpu.memory_space<vmem>>, vector<64x1xf32>
    %18 = vector.broadcast %17 : vector<64x1xf32> to vector<64x256xf32>
    %19 = arith.mulf %16, %18 : vector<64x256xf32>
    %cst_14 = arith.constant dense<0.000000e+00> : vector<256xf32>
    %20 = vector.multi_reduction <add>, %19, %cst_14 [0] : vector<64x256xf32> to vector<256xf32>
    %21 = vector.shape_cast %20 : vector<256xf32> to vector<1x256xf32>
    %c0_15 = arith.constant 0 : index
    %c0_16 = arith.constant 0 : index
    %22 = memref.load %arg7[%c0_15, %c0_16] : memref<1x1xf32, #tpu.memory_space<smem>>
    %23 = vector.broadcast %22 : f32 to vector<1x256xf32>
    %24 = arith.addf %21, %23 : vector<1x256xf32>
    %c0_17 = arith.constant 0 : index
    %c0_18 = arith.constant 0 : index
    %25 = vector.load %arg8[%c0_17, %c0_18] : memref<1x256xf32, #tpu.memory_space<vmem>>, vector<1x256xf32>
    tpu.vector_store %arg8[%c0_17, %c0_18], %24 {strides = array<i32>} : memref<1x256xf32, #tpu.memory_space<vmem>>, vector<1x256xf32>,
    return
  }
  func.func @transform_0(%arg0: i32) -> (i32, i32) {
    %c0_i32 = arith.constant 0 : i32
    %c0_i32_0 = arith.constant 0 : i32
    return %arg0, %c0_i32 : i32, i32
  }
  func.func @transform_1(%arg0: i32) -> (i32, i32) {
    %c0_i32 = arith.constant 0 : i32
    %c0_i32_0 = arith.constant 0 : i32
    %c0_i32_1 = arith.constant 0 : i32
    return %c0_i32, %c0_i32_0 : i32, i32
  }
  func.func @transform_2(%arg0: i32) -> (i32, i32) {
    %c0_i32 = arith.constant 0 : i32
    %c0_i32_0 = arith.constant 0 : i32
    %c0_i32_1 = arith.constant 0 : i32
    return %c0_i32, %c0_i32_0 : i32, i32
  }
  func.func @transform_3(%arg0: i32) -> (i32, i32) {
    %c0_i32 = arith.constant 0 : i32
    %c0_i32_0 = arith.constant 0 : i32
    %c0_i32_1 = arith.constant 0 : i32
    return %c0_i32, %c0_i32_0 : i32, i32
  }
  func.func @transform_4(%arg0: i32) -> (i32, i32) {
    %c0_i32 = arith.constant 0 : i32
    %c0_i32_0 = arith.constant 0 : i32
    %c0_i32_1 = arith.constant 0 : i32
    return %c0_i32, %c0_i32_0 : i32, i32
  }
  func.func @transform_5(%arg0: i32) -> (i32, i32) {
    %c0_i32 = arith.constant 0 : i32
    %c0_i32_0 = arith.constant 0 : i32
    %c0_i32_1 = arith.constant 0 : i32
    return %c0_i32, %c0_i32_0 : i32, i32
  }
  func.func @transform_6(%arg0: i32) -> (i32, i32) {
    %c0_i32 = arith.constant 0 : i32
    %c0_i32_0 = arith.constant 0 : i32
    %c0_i32_1 = arith.constant 0 : i32
    return %c0_i32, %c0_i32_0 : i32, i32
  }
  func.func @transform_7(%arg0: i32) -> (i32, i32) {
    %c0_i32 = arith.constant 0 : i32
    %c0_i32_0 = arith.constant 0 : i32
    return %c0_i32, %arg0 : i32, i32
  }
}

</mosaic_0001>

<llo_original>
// kernel: mlp_forward.1
$region0: #{mlp_forward.1}
  #allocation0 [shape = 'u32[]', space=smem, size = 0x4, offset = 0x4, fixed_abs, tag = 'smem constant byte address 0x4 - core index']
  #allocation1 [shape = 'u32[144,128]{1,0:T(1,128)}', space=vmem, size = 0x12000, scoped, tag = 'internal scratch']
  #allocation2 [shape = 'f32[1,1]{1,0:T(1,128)S(6)}', space=smem, size = 0x200, scoped, tag = 'scoped memory for mlp_forward.1']
  %s0 = inlined_call_operand.vmem [shape: f32[300,18], index: 0, kind: input, shape index: {}]
  %s1 = inlined_call_operand.vmem [shape: bf16[128,18], index: 1, kind: input, shape index: {}]
  %s2 = inlined_call_operand.vmem [shape: f32[128,1], index: 2, kind: input, shape index: {}]
  %s3 = inlined_call_operand.vmem [shape: bf16[64,128], index: 3, kind: input, shape index: {}]
  %s4 = inlined_call_operand.vmem [shape: f32[64,1], index: 4, kind: input, shape index: {}]
  %s5 = inlined_call_operand.vmem [shape: f32[64,1], index: 5, kind: input, shape index: {}]
  %s6 = inlined_call_operand.<no memory space> [shape: f32[1,1], index: 6, kind: input, shape index: {}]
  %s7 = inlined_call_operand.hbm [shape: f32[1,300], index: 7, kind: output, shape index: {}]
  %s8 = sld [smem:[#allocation0]]
  $region61: #{mlp_forward.1} parent=0
    _
  %s10 = ssub.s32 1, %s8
  %s11 = scalar_select 0, %s10, %s8
  %12 = sst [smem:[#allocation2]] %s6
  $region1: #{mlp_forward.1} parent=0
    #allocation3 [shape = 'u8[2048]{0}', space=vmem, size = 0x800, scoped, tag = 'output window, operand 0']
    #allocation4 [shape = 's32[2]{0}', space=sflag, size = 0x8, scoped, tag = 'scoped memory for mlp_forward.1']
    %13 = vsyncpa [#allocation4], 0
    %s14 = scalar_lea.sflag [#allocation4], 1
    %15 = vsyncpa %s14, 0
    loop: start=0, step=1, limit=4
    $region2: #{mlp_forward.1} parent=1 // loop_pre_header
      _
    $region3: #{mlp_forward.1} parent=1 // loop_header
      %s17 = sphi 0, %s21
      %p18 = scmp.ge.s32.totalorder %s17, 4
      %s27 = sphi 0, %s29
      %s30 = sphi 0, %s27
      %s31 = sphi 0, %s30
      %s47 = sphi 0, %s31
      %s51 = sphi 0, %s51
      %s53 = sphi 0, %s51
      %s54 = sphi 0, %s53
      %s68 = sphi 0, %s54
      %s72 = sphi 0, %s72
      %s74 = sphi 0, %s72
      %s75 = sphi 0, %s74
      %s89 = sphi 0, %s75
      %s93 = sphi 0, %s93
      %s95 = sphi 0, %s93
      %s96 = sphi 0, %s95
      %s110 = sphi 0, %s96
      %s114 = sphi 0, %s114
      %s116 = sphi 0, %s114
      %s117 = sphi 0, %s116
      %s131 = sphi 0, %s117
      %s135 = sphi 0, %s135
      %s137 = sphi 0, %s135
      %s138 = sphi 0, %s137
      %s152 = sphi 0, %s138
      %s156 = sphi 0, %s156
      %s158 = sphi 0, %s156
      %s159 = sphi 0, %s158
      %s173 = sphi 0, %s159
      %s179 = sphi 0, %s181
      %s182 = sphi 0, %s179
      %s183 = sphi 0, %s182
      %s199 = sphi 0, %s183
    $region4: #{mlp_forward.1} parent=1 // loop_header_branch
      %20 = sbr.rel (%p18) target = $region8
    $region5: #{mlp_forward.1} parent=1 // loop_body
      %s22 = ssub.s32 %s17, 1
      %s23 = ssub.s32 %s17, 2
      %s24 = sadd.s32 %s17, 1
      %s25 = ssub.s32 %s17, %s24
      %p26 = scmp.eq.s32.totalorder %s25, 0
      %s28 = sadd.s32 %s27, 1
      %s29 = scalar_select %p26, %s27, %s28
      %p32 = pneg %p26
      %p33 = scmp.eq.s32.totalorder %s17, 1
      %p34 = por %p32, %p33
      %p35 = scmp.ne.s32.totalorder %s27, %s30
      %p36 = scmp.eq.s32.totalorder %s17, 0
      %p37 = por %p35, %p36
      %p38 = scmp.ne.s32.totalorder %s27, %s30
      %p39 = scmp.eq.s32.totalorder %s22, 1
      %p40 = por %p38, %p39
      %p41 = scmp.ne.s32.totalorder %s30, %s31
      %p42 = scmp.eq.s32.totalorder %s22, 0
      %p43 = por %p41, %p42
      %p44 = scmp.ne.s32.totalorder %s30, %s31
      %p45 = scmp.eq.s32.totalorder %s23, 1
      %p46 = por %p44, %p45
      %p48 = scmp.ne.s32.totalorder %s31, %s47
      %p49 = scmp.eq.s32.totalorder %s23, 0
      %p50 = por %p48, %p49
      %s52 = sadd.s32 %s51, 1
      %p55 = scmp.eq.s32.totalorder %s17, 1
      %p56 = scmp.ne.s32.totalorder %s51, %s53
      %p57 = scmp.eq.s32.totalorder %s17, 0
      %p58 = por %p56, %p57
      %p59 = scmp.ne.s32.totalorder %s51, %s53
      %p60 = scmp.eq.s32.totalorder %s22, 1
      %p61 = por %p59, %p60
      %p62 = scmp.ne.s32.totalorder %s53, %s54
      %p63 = scmp.eq.s32.totalorder %s22, 0
      %p64 = por %p62, %p63
      %p65 = scmp.ne.s32.totalorder %s53, %s54
      %p66 = scmp.eq.s32.totalorder %s23, 1
      %p67 = por %p65, %p66
      %p69 = scmp.ne.s32.totalorder %s54, %s68
      %p70 = scmp.eq.s32.totalorder %s23, 0
      %p71 = por %p69, %p70
      %s73 = sadd.s32 %s72, 1
      %p76 = scmp.eq.s32.totalorder %s17, 1
      %p77 = scmp.ne.s32.totalorder %s72, %s74
      %p78 = scmp.eq.s32.totalorder %s17, 0
      %p79 = por %p77, %p78
      %p80 = scmp.ne.s32.totalorder %s72, %s74
      %p81 = scmp.eq.s32.totalorder %s22, 1
      %p82 = por %p80, %p81
      %p83 = scmp.ne.s32.totalorder %s74, %s75
      %p84 = scmp.eq.s32.totalorder %s22, 0
      %p85 = por %p83, %p84
      %p86 = scmp.ne.s32.totalorder %s74, %s75
      %p87 = scmp.eq.s32.totalorder %s23, 1
      %p88 = por %p86, %p87
      %p90 = scmp.ne.s32.totalorder %s75, %s89
      %p91 = scmp.eq.s32.totalorder %s23, 0
      %p92 = por %p90, %p91
      %s94 = sadd.s32 %s93, 1
      %p97 = scmp.eq.s32.totalorder %s17, 1
      %p98 = scmp.ne.s32.totalorder %s93, %s95
      %p99 = scmp.eq.s32.totalorder %s17, 0
      %p100 = por %p98, %p99
      %p101 = scmp.ne.s32.totalorder %s93, %s95
      %p102 = scmp.eq.s32.totalorder %s22, 1
      %p103 = por %p101, %p102
      %p104 = scmp.ne.s32.totalorder %s95, %s96
      %p105 = scmp.eq.s32.totalorder %s22, 0
      %p106 = por %p104, %p105
      %p107 = scmp.ne.s32.totalorder %s95, %s96
      %p108 = scmp.eq.s32.totalorder %s23, 1
      %p109 = por %p107, %p108
      %p111 = scmp.ne.s32.totalorder %s96, %s110
      %p112 = scmp.eq.s32.totalorder %s23, 0
      %p113 = por %p111, %p112
      %s115 = sadd.s32 %s114, 1
      %p118 = scmp.eq.s32.totalorder %s17, 1
      %p119 = scmp.ne.s32.totalorder %s114, %s116
      %p120 = scmp.eq.s32.totalorder %s17, 0
      %p121 = por %p119, %p120
      %p122 = scmp.ne.s32.totalorder %s114, %s116
      %p123 = scmp.eq.s32.totalorder %s22, 1
      %p124 = por %p122, %p123
      %p125 = scmp.ne.s32.totalorder %s116, %s117
      %p126 = scmp.eq.s32.totalorder %s22, 0
      %p127 = por %p125, %p126
      %p128 = scmp.ne.s32.totalorder %s116, %s117
      %p129 = scmp.eq.s32.totalorder %s23, 1
      %p130 = por %p128, %p129
      %p132 = scmp.ne.s32.totalorder %s117, %s131
      %p133 = scmp.eq.s32.totalorder %s23, 0
      %p134 = por %p132, %p133
      %s136 = sadd.s32 %s135, 1
      %p139 = scmp.eq.s32.totalorder %s17, 1
      %p140 = scmp.ne.s32.totalorder %s135, %s137
      %p141 = scmp.eq.s32.totalorder %s17, 0
      %p142 = por %p140, %p141
      %p143 = scmp.ne.s32.totalorder %s135, %s137
      %p144 = scmp.eq.s32.totalorder %s22, 1
      %p145 = por %p143, %p144
      %p146 = scmp.ne.s32.totalorder %s137, %s138
      %p147 = scmp.eq.s32.totalorder %s22, 0
      %p148 = por %p146, %p147
      %p149 = scmp.ne.s32.totalorder %s137, %s138
      %p150 = scmp.eq.s32.totalorder %s23, 1
      %p151 = por %p149, %p150
      %p153 = scmp.ne.s32.totalorder %s138, %s152
      %p154 = scmp.eq.s32.totalorder %s23, 0
      %p155 = por %p153, %p154
      %s157 = sadd.s32 %s156, 1
      %p160 = scmp.eq.s32.totalorder %s17, 1
      %p161 = scmp.ne.s32.totalorder %s156, %s158
      %p162 = scmp.eq.s32.totalorder %s17, 0
      %p163 = por %p161, %p162
      %p164 = scmp.ne.s32.totalorder %s156, %s158
      %p165 = scmp.eq.s32.totalorder %s22, 1
      %p166 = por %p164, %p165
      %p167 = scmp.ne.s32.totalorder %s158, %s159
      %p168 = scmp.eq.s32.totalorder %s22, 0
      %p169 = por %p167, %p168
      %p170 = scmp.ne.s32.totalorder %s158, %s159
      %p171 = scmp.eq.s32.totalorder %s23, 1
      %p172 = por %p170, %p171
      %p174 = scmp.ne.s32.totalorder %s159, %s173
      %p175 = scmp.eq.s32.totalorder %s23, 0
      %p176 = por %p174, %p175
      %s177 = ssub.s32 %s17, %s24
      %p178 = scmp.eq.s32.totalorder %s177, 0
      %s180 = sadd.s32 %s179, 1
      %s181 = scalar_select %p178, %s179, %s180
      %p184 = pneg %p178
      %p185 = scmp.eq.s32.totalorder %s17, 1
      %p186 = por %p184, %p185
      %p187 = scmp.ne.s32.totalorder %s179, %s182
      %p188 = scmp.eq.s32.totalorder %s17, 0
      %p189 = por %p187, %p188
      %p190 = scmp.ne.s32.totalorder %s179, %s182
      %p191 = scmp.eq.s32.totalorder %s22, 1
      %p192 = por %p190, %p191
      %p193 = scmp.ne.s32.totalorder %s182, %s183
      %p194 = scmp.eq.s32.totalorder %s22, 0
      %p195 = por %p193, %p194
      %p196 = scmp.ne.s32.totalorder %s182, %s183
      %p197 = scmp.eq.s32.totalorder %s23, 1
      %p198 = por %p196, %p197
      %p200 = scmp.ne.s32.totalorder %s183, %s199
      %p201 = scmp.eq.s32.totalorder %s23, 0
      %p202 = por %p200, %p201
      %p203 = scmp.le.s32.totalorder 1, %s17
      %p204 = scmp.lt.s32.totalorder %s17, 3
      %p205 = pnand %p203, %p204
      %p206 = pneg %p205
      // Predicated region
      $region9: #{mlp_forward.1} parent=5 // pred_check
        _
      $region10: #{mlp_forward.1} parent=5 // pred_check_branch
        %208 = sbr.rel (%p205) target = $region12
      $region11: #{mlp_forward.1} parent=5 // pred_region
        %s209 = ssub.s32 %s17, 1
        // Predicated region
        $region13: #{mlp_forward.1} parent=11 // pred_check
          %p210 = pneg %p64
        $region14: #{mlp_forward.1} parent=11 // pred_check_branch
          %212 = sbr.rel (%p210) target = $region16
        $region15: #{mlp_forward.1} parent=11 // pred_region
          _
        $region16: #{mlp_forward.1} parent=11 // pred_fallthru
          _
        // Predicated region
        $region17: #{mlp_forward.1} parent=11 // pred_check
          %p213 = pneg %p85
        $region18: #{mlp_forward.1} parent=11 // pred_check_branch
          %215 = sbr.rel (%p213) target = $region20
        $region19: #{mlp_forward.1} parent=11 // pred_region
          _
        $region20: #{mlp_forward.1} parent=11 // pred_fallthru
          _
        // Predicated region
        $region21: #{mlp_forward.1} parent=11 // pred_check
          %p216 = pneg %p106
        $region22: #{mlp_forward.1} parent=11 // pred_check_branch
          %218 = sbr.rel (%p216) target = $region24
        $region23: #{mlp_forward.1} parent=11 // pred_region
          _
        $region24: #{mlp_forward.1} parent=11 // pred_fallthru
          _
        // Predicated region
        $region25: #{mlp_forward.1} parent=11 // pred_check
          %p219 = pneg %p127
        $region26: #{mlp_forward.1} parent=11 // pred_check_branch
          %221 = sbr.rel (%p219) target = $region28
        $region27: #{mlp_forward.1} parent=11 // pred_region
          _
        $region28: #{mlp_forward.1} parent=11 // pred_fallthru
          _
        // Predicated region
        $region29: #{mlp_forward.1} parent=11 // pred_check
          %p222 = pneg %p148
        $region30: #{mlp_forward.1} parent=11 // pred_check_branch
          %224 = sbr.rel (%p222) target = $region32
        $region31: #{mlp_forward.1} parent=11 // pred_region
          _
        $region32: #{mlp_forward.1} parent=11 // pred_fallthru
          _
        // Predicated region
        $region33: #{mlp_forward.1} parent=11 // pred_check
          %p225 = pneg %p169
        $region34: #{mlp_forward.1} parent=11 // pred_check_branch
          %227 = sbr.rel (%p225) target = $region36
        $region35: #{mlp_forward.1} parent=11 // pred_region
          _
        $region36: #{mlp_forward.1} parent=11 // pred_fallthru
          _
      $region12: #{mlp_forward.1} parent=5 // pred_fallthru
        _
      %p228 = scmp.lt.s32.totalorder %s17, 2
      // Predicated region
      $region37: #{mlp_forward.1} parent=5 // pred_check
        %p229 = pneg %p228
      $region38: #{mlp_forward.1} parent=5 // pred_check_branch
        %231 = sbr.rel (%p229) target = $region40
      $region39: #{mlp_forward.1} parent=5 // pred_region
        // Predicated region
        $region41: #{mlp_forward.1} parent=39 // pred_check
          %p232 = pneg %p37
        $region42: #{mlp_forward.1} parent=39 // pred_check_branch
          %234 = sbr.rel (%p232) target = $region44
        $region43: #{mlp_forward.1} parent=39 // pred_region
          %s235 = smul.u32 32, %s17
          %s236 = ssub.s32 38, %s235
          %p237 = scmp.lt.s32.totalorder %s236, 32
          %s238 = scalar_select %p237, %s236, 32
          %s239 = smul.u32 128, %s238
          %p240 = scmp.lt.s32.totalorder %s235, 37
          %s241 = scalar_select %p240, %s235, 37
          %s242 = smul.addr %s241, 8
          %s243 = scalar_lea.vmem %s0, %s242
          %s244 = smul.u32 32, %s17
          %s245 = ssub.s32 38, %s244
          %p246 = scmp.lt.s32.totalorder %s245, 32
          %s247 = scalar_select %p246, %s245, 32
          %s248 = smul.u32 128, %s247
        $region44: #{mlp_forward.1} parent=39 // pred_fallthru
          _
      $region40: #{mlp_forward.1} parent=5 // pred_fallthru
        _
      %p249 = scmp.le.s32.totalorder 1, %s17
      %p250 = scmp.lt.s32.totalorder %s17, 3
      %p251 = pnand %p249, %p250
      %p252 = pneg %p251
      // Predicated region
      $region45: #{mlp_forward.1} parent=5 // pred_check
        _
      $region46: #{mlp_forward.1} parent=5 // pred_check_branch
        %254 = sbr.rel (%p251) target = $region48
      $region47: #{mlp_forward.1} parent=5 // pred_region
        %s255 = ssub.s32 %s17, 1
        %s256 = smul.u32 32, %s22
        %s257 = ssub.s32 38, %s256
        %p258 = scmp.lt.s32.totalorder %s257, 32
        %s259 = scalar_select %p258, %s257, 32
        %s260 = smul.u32 128, %s259
        %p261 = scmp.lt.s32.totalorder %s256, 37
        %s262 = scalar_select %p261, %s256, 37
        %s263 = smul.addr %s262, 8
        %s264 = scalar_lea.vmem %s0, %s263
        %p265 = pneg %p43
        %p266 = pneg %p40
        %p267 = pneg %p64
        %p268 = pneg %p61
        %p269 = pneg %p85
        %p270 = pneg %p82
        %p271 = pneg %p106
        %p272 = pneg %p103
        %p273 = pneg %p127
        %p274 = pneg %p124
        %p275 = pneg %p148
        %p276 = pneg %p145
        %p277 = pneg %p169
        %p278 = pneg %p166
        %p279 = pneg %p195
        %p280 = pneg %p192
        %s281 = sand.u32 %s182, 1
        %s282 = scalar_lea.sflag [#allocation4], %s281
        %s283 = sand.u32 %s182, 1
        %s284 = smul.addr %s283, 2
        %s285 = scalar_lea.vmem [#allocation3], %s284
        %s286 = smul.u32 32, %s22
        %s287 = ssub.s32 38, %s286
        %p288 = scmp.lt.s32.totalorder %s287, 32
        %s289 = scalar_select %p288, %s287, 32
        %s290 = smul.u32 128, %s289
        %p291 = scmp.lt.s32.totalorder %s286, 37
        %s292 = scalar_select %p291, %s286, 37
        %s293 = smul.addr %s292, 8
        %s294 = scalar_lea.vmem %s0, %s293
        %s295 = smul.u32 32, %s22
        %s296 = ssub.s32 38, %s295
        %p297 = scmp.lt.s32.totalorder %s296, 32
        %s298 = scalar_select %p297, %s296, 32
        %s299 = smul.u32 128, %s298
        %s300 = smul.u32 2, %s22
        %s301 = ssub.s32 3, %s300
        %p302 = scmp.lt.s32.totalorder %s301, 2
        %s303 = scalar_select %p302, %s301, 2
        %s304 = smul.u32 16, %s303
        %v306 = vld [vmem:[%s294] sm:$0xff]
        %v307 = vld [vmem:[%s294 + $0x8] sm:$0xff]
        %v308 = vld [vmem:[%s294 + $0x10] sm:$0xff]
        %v309 = vld [vmem:[%s294 + $0x18] sm:$0xff]
        %v310 = vld [vmem:[%s294 + $0x20] sm:$0xff]
        %v311 = vld [vmem:[%s294 + $0x28] sm:$0xff]
        %v312 = vld [vmem:[%s294 + $0x30] sm:$0xff]
        %v313 = vld [vmem:[%s294 + $0x38] sm:$0xff]
        %v314 = vld [vmem:[%s294 + $0x40] sm:$0xff]
        %v315 = vld [vmem:[%s294 + $0x48] sm:$0xff]
        %v316 = vld [vmem:[%s294 + $0x50] sm:$0xff]
        %v317 = vld [vmem:[%s294 + $0x58] sm:$0xff]
        %v318 = vld [vmem:[%s294 + $0x60] sm:$0xff]
        %v319 = vld [vmem:[%s294 + $0x68] sm:$0xff]
        %v320 = vld [vmem:[%s294 + $0x70] sm:$0xff]
        %v321 = vld [vmem:[%s294 + $0x78] sm:$0xff]
        %v322 = vld [vmem:[%s294 + $0x80] sm:$0xff]
        %v323 = vld [vmem:[%s294 + $0x88] sm:$0xff]
        %v324 = vld [vmem:[%s294 + $0x90] sm:$0xff]
        %v325 = vld [vmem:[%s294 + $0x98] sm:$0xff]
        %v326 = vld [vmem:[%s294 + $0xa0] sm:$0xff]
        %v327 = vld [vmem:[%s294 + $0xa8] sm:$0xff]
        %v328 = vld [vmem:[%s294 + $0xb0] sm:$0xff]
        %v329 = vld [vmem:[%s294 + $0xb8] sm:$0xff]
        %v330 = vld [vmem:[%s294 + $0xc0] sm:$0xff]
        %v331 = vld [vmem:[%s294 + $0xc8] sm:$0xff]
        %v332 = vld [vmem:[%s294 + $0xd0] sm:$0xff]
        %v333 = vld [vmem:[%s294 + $0xd8] sm:$0xff]
        %v334 = vld [vmem:[%s294 + $0xe0] sm:$0xff]
        %v335 = vld [vmem:[%s294 + $0xe8] sm:$0xff]
        %v336 = vld [vmem:[%s294 + $0xf0] sm:$0xff]
        %v337 = vld [vmem:[%s294 + $0xf8] sm:$0xff]
        %v338 = vpack.c.bf16 %v307, %v306
        %v339 = vpack.c.bf16 %v309, %v308
        %v340 = vpack.c.bf16 %v311, %v310
        %v341 = vpack.c.bf16 %v313, %v312
        %v342 = vpack.c.bf16 %v315, %v314
        %v343 = vpack.c.bf16 %v317, %v316
        %v344 = vpack.c.bf16 %v319, %v318
        %v345 = vpack.c.bf16 %v321, %v320
        %v346 = vpack.c.bf16 %v323, %v322
        %v347 = vpack.c.bf16 %v325, %v324
        %v348 = vpack.c.bf16 %v327, %v326
        %v349 = vpack.c.bf16 %v329, %v328
        %v350 = vpack.c.bf16 %v331, %v330
        %v351 = vpack.c.bf16 %v333, %v332
        %v352 = vpack.c.bf16 %v335, %v334
        %v353 = vpack.c.bf16 %v337, %v336
        %v354 = vld [vmem:[%s1] sm:$0xf]
        %v355 = vld [vmem:[%s1 + $0x4] sm:$0xf]
        %v356 = vld [vmem:[%s1 + $0x8] sm:$0xf]
        %v357 = vld [vmem:[%s1 + $0xc] sm:$0xf]
        %v358 = vld [vmem:[%s1 + $0x10] sm:$0xf]
        %v359 = vld [vmem:[%s1 + $0x14] sm:$0xf]
        %v360 = vld [vmem:[%s1 + $0x18] sm:$0xf]
        %v361 = vld [vmem:[%s1 + $0x1c] sm:$0xf]
        %v362 = vld [vmem:[%s1 + $0x20] sm:$0xf]
        %v363 = vld [vmem:[%s1 + $0x24] sm:$0xf]
        %v364 = vld [vmem:[%s1 + $0x28] sm:$0xf]
        %v365 = vld [vmem:[%s1 + $0x2c] sm:$0xf]
        %v366 = vld [vmem:[%s1 + $0x30] sm:$0xf]
        %v367 = vld [vmem:[%s1 + $0x34] sm:$0xf]
        %v368 = vld [vmem:[%s1 + $0x38] sm:$0xf]
        %v369 = vld [vmem:[%s1 + $0x3c] sm:$0xf]
        %v370 = vld [vmem:[%s2] sm:$0xff]
        %v371 = vld [vmem:[%s2 + $0x8] sm:$0xff]
        %v372 = vld [vmem:[%s2 + $0x10] sm:$0xff]
        %v373 = vld [vmem:[%s2 + $0x18] sm:$0xff]
        %v374 = vld [vmem:[%s2 + $0x20] sm:$0xff]
        %v375 = vld [vmem:[%s2 + $0x28] sm:$0xff]
        %v376 = vld [vmem:[%s2 + $0x30] sm:$0xff]
        %v377 = vld [vmem:[%s2 + $0x38] sm:$0xff]
        %v378 = vld [vmem:[%s2 + $0x40] sm:$0xff]
        %v379 = vld [vmem:[%s2 + $0x48] sm:$0xff]
        %v380 = vld [vmem:[%s2 + $0x50] sm:$0xff]
        %v381 = vld [vmem:[%s2 + $0x58] sm:$0xff]
        %v382 = vld [vmem:[%s2 + $0x60] sm:$0xff]
        %v383 = vld [vmem:[%s2 + $0x68] sm:$0xff]
        %v384 = vld [vmem:[%s2 + $0x70] sm:$0xff]
        %v385 = vld [vmem:[%s2 + $0x78] sm:$0xff]
        %387 = vset.pattern.permute.xlu0 0
        %388 = vperm.xlu0 %387, %v370
        %v389 = vpop.permute.xlu0 %388
        %392 = vset.pattern.permute.xlu0 0
        %393 = vperm.xlu0 %392, %v371
        %v394 = vpop.permute.xlu0 %393
        %397 = vset.pattern.permute.xlu0 0
        %398 = vperm.xlu0 %397, %v372
        %v399 = vpop.permute.xlu0 %398
        %402 = vset.pattern.permute.xlu0 0
        %403 = vperm.xlu0 %402, %v373
        %v404 = vpop.permute.xlu0 %403
        %407 = vset.pattern.permute.xlu0 0
        %408 = vperm.xlu0 %407, %v374
        %v409 = vpop.permute.xlu0 %408
        %412 = vset.pattern.permute.xlu0 0
        %413 = vperm.xlu0 %412, %v375
        %v414 = vpop.permute.xlu0 %413
        %417 = vset.pattern.permute.xlu0 0
        %418 = vperm.xlu0 %417, %v376
        %v419 = vpop.permute.xlu0 %418
        %422 = vset.pattern.permute.xlu0 0
        %423 = vperm.xlu0 %422, %v377
        %v424 = vpop.permute.xlu0 %423
        %427 = vset.pattern.permute.xlu0 0
        %428 = vperm.xlu0 %427, %v378
        %v429 = vpop.permute.xlu0 %428
        %432 = vset.pattern.permute.xlu0 0
        %433 = vperm.xlu0 %432, %v379
        %v434 = vpop.permute.xlu0 %433
        %437 = vset.pattern.permute.xlu0 0
        %438 = vperm.xlu0 %437, %v380
        %v439 = vpop.permute.xlu0 %438
        %442 = vset.pattern.permute.xlu0 0
        %443 = vperm.xlu0 %442, %v381
        %v444 = vpop.permute.xlu0 %443
        %447 = vset.pattern.permute.xlu0 0
        %448 = vperm.xlu0 %447, %v382
        %v449 = vpop.permute.xlu0 %448
        %452 = vset.pattern.permute.xlu0 0
        %453 = vperm.xlu0 %452, %v383
        %v454 = vpop.permute.xlu0 %453
        %457 = vset.pattern.permute.xlu0 0
        %458 = vperm.xlu0 %457, %v384
        %v459 = vpop.permute.xlu0 %458
        %462 = vset.pattern.permute.xlu0 0
        %463 = vperm.xlu0 %462, %v385
        %v464 = vpop.permute.xlu0 %463
        %v482 = vunpack.c.l.b16 %v354
        %v483 = vunpack.c.l.b16 %v355
        %v484 = vunpack.c.l.b16 %v356
        %v485 = vunpack.c.l.b16 %v357
        %v486 = vunpack.c.l.b16 %v358
        %v487 = vunpack.c.l.b16 %v359
        %v488 = vunpack.c.l.b16 %v360
        %v489 = vunpack.c.l.b16 %v361
        %v490 = vunpack.c.l.b16 %v362
        %v491 = vunpack.c.l.b16 %v363
        %v492 = vunpack.c.l.b16 %v364
        %v493 = vunpack.c.l.b16 %v365
        %v494 = vunpack.c.l.b16 %v366
        %v495 = vunpack.c.l.b16 %v367
        %v496 = vunpack.c.l.b16 %v368
        %v497 = vunpack.c.l.b16 %v369
        %v498 = vpack.c.b16 %v483, %v482
        %v499 = vpack.c.b16 %v485, %v484
        %v500 = vpack.c.b16 %v487, %v486
        %v501 = vpack.c.b16 %v489, %v488
        %v502 = vpack.c.b16 %v491, %v490
        %v503 = vpack.c.b16 %v493, %v492
        %v504 = vpack.c.b16 %v495, %v494
        %v505 = vpack.c.b16 %v497, %v496
        %vm506 = vcmask 146432
        %v508 = vsel %vm506, %v498, 0
        %v511 = vsel %vm506, %v499, 0
        %v514 = vsel %vm506, %v500, 0
        %v517 = vsel %vm506, %v501, 0
        %v520 = vsel %vm506, %v502, 0
        %v523 = vsel %vm506, %v503, 0
        %v526 = vsel %vm506, %v504, 0
        %v529 = vsel %vm506, %v505, 0
        %v532 = vsel %vm506, %v338, 0
        %v535 = vsel %vm506, %v339, 0
        %v538 = vsel %vm506, %v340, 0
        %v541 = vsel %vm506, %v341, 0
        %v544 = vsel %vm506, %v342, 0
        %v547 = vsel %vm506, %v343, 0
        %v550 = vsel %vm506, %v344, 0
        %v553 = vsel %vm506, %v345, 0
        %v556 = vsel %vm506, %v346, 0
        %v559 = vsel %vm506, %v347, 0
        %v562 = vsel %vm506, %v348, 0
        %v565 = vsel %vm506, %v349, 0
        %v568 = vsel %vm506, %v350, 0
        %v571 = vsel %vm506, %v351, 0
        %v574 = vsel %vm506, %v352, 0
        %v577 = vsel %vm506, %v353, 0
        %579 = vmatprep.subr.bf16.mxu0 0
        %580 = vmatpush1.bf16.xpose.msra.mxu0 %v532
        %581 = vmatprep.subr.bf16.mxu0 0
        %582 = vmatpush1.bf16.xpose.msra.mxu0 %v535
        %583 = vmatprep.subr.bf16.mxu0 0
        %584 = vmatpush1.bf16.xpose.msra.mxu0 %v538
        %585 = vmatprep.subr.bf16.mxu0 0
        %586 = vmatpush1.bf16.xpose.msra.mxu0 %v541
        %587 = vmatprep.subr.bf16.mxu0 0
        %588 = vmatpush1.bf16.xpose.msra.mxu0 %v544
        %589 = vmatprep.subr.bf16.mxu0 0
        %590 = vmatpush1.bf16.xpose.msra.mxu0 %v547
        %591 = vmatprep.subr.bf16.mxu0 0
        %592 = vmatpush1.bf16.xpose.msra.mxu0 %v550
        %593 = vmatprep.subr.bf16.mxu0 0
        %594 = vmatpush1.bf16.xpose.msra.mxu0 %v553
        %595 = vmatprep.subr.bf16.mxu0 0
        %596 = vmatpush1.bf16.xpose.msra.mxu0 %v556
        %597 = vmatprep.subr.bf16.mxu0 0
        %598 = vmatpush1.bf16.xpose.msra.mxu0 %v559
        %599 = vmatprep.subr.bf16.mxu0 0
        %600 = vmatpush1.bf16.xpose.msra.mxu0 %v562
        %601 = vmatprep.subr.bf16.mxu0 0
        %602 = vmatpush1.bf16.xpose.msra.mxu0 %v565
        %603 = vmatprep.subr.bf16.mxu0 0
        %604 = vmatpush1.bf16.xpose.msra.mxu0 %v568
        %605 = vmatprep.subr.bf16.mxu0 0
        %606 = vmatpush1.bf16.xpose.msra.mxu0 %v571
        %607 = vmatprep.subr.bf16.mxu0 0
        %608 = vmatpush1.bf16.xpose.msra.mxu0 %v574
        %609 = vmatprep.subr.bf16.mxu0 0
        %610 = vmatpush1.bf16.xpose.msra.mxu0 %v577
        %611 = vmatprep.mubr.bf16.mxu0 0
        %612 = vmatmul.mubr.bf16.gmra.mrb[0].mxu0 %v508
        %v613 = vpop.f32.mrb[0].mxu0
        %v614 = vadd.f32 %v389, %v613
        %v615 = vpop.f32.mrb[0].mxu0
        %v616 = vadd.f32 %v389, %v615
        %v617 = vpop.f32.mrb[0].mxu0
        %v618 = vadd.f32 %v394, %v617
        %v619 = vpop.f32.mrb[0].mxu0
        %v620 = vadd.f32 %v394, %v619
        %621 = vmatprep.mubr.bf16.mxu0 0
        %622 = vmatmul.mubr.bf16.gmra.mrb[0].mxu0 %v511
        %v623 = vpop.f32.mrb[0].mxu0
        %v624 = vadd.f32 %v399, %v623
        %v625 = vpop.f32.mrb[0].mxu0
        %v626 = vadd.f32 %v399, %v625
        %v627 = vpop.f32.mrb[0].mxu0
        %v628 = vadd.f32 %v404, %v627
        %v629 = vpop.f32.mrb[0].mxu0
        %v630 = vadd.f32 %v404, %v629
        %631 = vmatprep.mubr.bf16.mxu0 0
        %632 = vmatmul.mubr.bf16.gmra.mrb[0].mxu0 %v514
        %v633 = vpop.f32.mrb[0].mxu0
        %v634 = vadd.f32 %v409, %v633
        %v635 = vpop.f32.mrb[0].mxu0
        %v636 = vadd.f32 %v409, %v635
        %v637 = vpop.f32.mrb[0].mxu0
        %v638 = vadd.f32 %v414, %v637
        %v639 = vpop.f32.mrb[0].mxu0
        %v640 = vadd.f32 %v414, %v639
        %641 = vmatprep.mubr.bf16.mxu0 0
        %642 = vmatmul.mubr.bf16.gmra.mrb[0].mxu0 %v517
        %v643 = vpop.f32.mrb[0].mxu0
        %v644 = vadd.f32 %v419, %v643
        %v645 = vpop.f32.mrb[0].mxu0
        %v646 = vadd.f32 %v419, %v645
        %v647 = vpop.f32.mrb[0].mxu0
        %v648 = vadd.f32 %v424, %v647
        %v649 = vpop.f32.mrb[0].mxu0
        %v650 = vadd.f32 %v424, %v649
        %651 = vmatprep.mubr.bf16.mxu0 0
        %652 = vmatmul.mubr.bf16.gmra.mrb[0].mxu0 %v520
        %v653 = vpop.f32.mrb[0].mxu0
        %v654 = vadd.f32 %v429, %v653
        %v655 = vpop.f32.mrb[0].mxu0
        %v656 = vadd.f32 %v429, %v655
        %v657 = vpop.f32.mrb[0].mxu0
        %v658 = vadd.f32 %v434, %v657
        %v659 = vpop.f32.mrb[0].mxu0
        %v660 = vadd.f32 %v434, %v659
        %661 = vmatprep.mubr.bf16.mxu0 0
        %662 = vmatmul.mubr.bf16.gmra.mrb[0].mxu0 %v523
        %v663 = vpop.f32.mrb[0].mxu0
        %v664 = vadd.f32 %v439, %v663
        %v665 = vpop.f32.mrb[0].mxu0
        %v666 = vadd.f32 %v439, %v665
        %v667 = vpop.f32.mrb[0].mxu0
        %v668 = vadd.f32 %v444, %v667
        %v669 = vpop.f32.mrb[0].mxu0
        %v670 = vadd.f32 %v444, %v669
        %671 = vmatprep.mubr.bf16.mxu0 0
        %672 = vmatmul.mubr.bf16.gmra.mrb[0].mxu0 %v526
        %v673 = vpop.f32.mrb[0].mxu0
        %v674 = vadd.f32 %v449, %v673
        %v675 = vpop.f32.mrb[0].mxu0
        %v676 = vadd.f32 %v449, %v675
        %v677 = vpop.f32.mrb[0].mxu0
        %v678 = vadd.f32 %v454, %v677
        %v679 = vpop.f32.mrb[0].mxu0
        %v680 = vadd.f32 %v454, %v679
        %681 = vmatprep.mubr.bf16.mxu0 0
        %682 = vmatmul.mubr.bf16.gmra.mrb[0].mxu0 %v529
        %v683 = vpop.f32.mrb[0].mxu0
        %v684 = vadd.f32 %v459, %v683
        %v685 = vpop.f32.mrb[0].mxu0
        %v686 = vadd.f32 %v459, %v685
        %v687 = vpop.f32.mrb[0].mxu0
        %v688 = vadd.f32 %v464, %v687
        %v689 = vpop.f32.mrb[0].mxu0
        %v690 = vadd.f32 %v464, %v689
        %691 = vdwg.mxu0
        %v692 = vmax.f32 %v614, 0.0
        %v693 = vmax.f32 %v616, 0.0
        %v694 = vmax.f32 %v618, 0.0
        %v695 = vmax.f32 %v620, 0.0
        %v696 = vmax.f32 %v624, 0.0
        %v697 = vmax.f32 %v626, 0.0
        %v698 = vmax.f32 %v628, 0.0
        %v699 = vmax.f32 %v630, 0.0
        %v700 = vmax.f32 %v634, 0.0
        %v701 = vmax.f32 %v636, 0.0
        %v702 = vmax.f32 %v638, 0.0
        %v703 = vmax.f32 %v640, 0.0
        %v704 = vmax.f32 %v644, 0.0
        %v705 = vmax.f32 %v646, 0.0
        %v706 = vmax.f32 %v648, 0.0
        %v707 = vmax.f32 %v650, 0.0
        %v708 = vmax.f32 %v654, 0.0
        %v709 = vmax.f32 %v656, 0.0
        %v710 = vmax.f32 %v658, 0.0
        %v711 = vmax.f32 %v660, 0.0
        %v712 = vmax.f32 %v664, 0.0
        %v713 = vmax.f32 %v666, 0.0
        %v714 = vmax.f32 %v668, 0.0
        %v715 = vmax.f32 %v670, 0.0
        %v716 = vmax.f32 %v674, 0.0
        %v717 = vmax.f32 %v676, 0.0
        %v718 = vmax.f32 %v678, 0.0
        %v719 = vmax.f32 %v680, 0.0
        %v720 = vmax.f32 %v684, 0.0
        %v721 = vmax.f32 %v686, 0.0
        %v722 = vmax.f32 %v688, 0.0
        %v723 = vmax.f32 %v690, 0.0
        %v724 = vld [vmem:[%s3] sm:$0xf]
        %v725 = vld [vmem:[%s3 + $0x4] sm:$0xf]
        %v726 = vld [vmem:[%s3 + $0x8] sm:$0xf]
        %v727 = vld [vmem:[%s3 + $0xc] sm:$0xf]
        %v728 = vld [vmem:[%s3 + $0x10] sm:$0xf]
        %v729 = vld [vmem:[%s3 + $0x14] sm:$0xf]
        %v730 = vld [vmem:[%s3 + $0x18] sm:$0xf]
        %v731 = vld [vmem:[%s3 + $0x1c] sm:$0xf]
        %v732 = vpack.c.bf16 %v694, %v692
        %v733 = vpack.c.bf16 %v695, %v693
        %v734 = vpack.c.bf16 %v698, %v696
        %v735 = vpack.c.bf16 %v699, %v697
        %v736 = vpack.c.bf16 %v702, %v700
        %v737 = vpack.c.bf16 %v703, %v701
        %v738 = vpack.c.bf16 %v706, %v704
        %v739 = vpack.c.bf16 %v707, %v705
        %v740 = vpack.c.bf16 %v710, %v708
        %v741 = vpack.c.bf16 %v711, %v709
        %v742 = vpack.c.bf16 %v714, %v712
        %v743 = vpack.c.bf16 %v715, %v713
        %v744 = vpack.c.bf16 %v718, %v716
        %v745 = vpack.c.bf16 %v719, %v717
        %v746 = vpack.c.bf16 %v722, %v720
        %v747 = vpack.c.bf16 %v723, %v721
        %v748 = vld [vmem:[%s4] sm:$0xff]
        %v749 = vld [vmem:[%s4 + $0x8] sm:$0xff]
        %v750 = vld [vmem:[%s4 + $0x10] sm:$0xff]
        %v751 = vld [vmem:[%s4 + $0x18] sm:$0xff]
        %v752 = vld [vmem:[%s4 + $0x20] sm:$0xff]
        %v753 = vld [vmem:[%s4 + $0x28] sm:$0xff]
        %v754 = vld [vmem:[%s4 + $0x30] sm:$0xff]
        %v755 = vld [vmem:[%s4 + $0x38] sm:$0xff]
        %757 = vset.pattern.permute.xlu0 0
        %758 = vperm.xlu0 %757, %v748
        %v759 = vpop.permute.xlu0 %758
        %762 = vset.pattern.permute.xlu0 0
        %763 = vperm.xlu0 %762, %v749
        %v764 = vpop.permute.xlu0 %763
        %767 = vset.pattern.permute.xlu0 0
        %768 = vperm.xlu0 %767, %v750
        %v769 = vpop.permute.xlu0 %768
        %772 = vset.pattern.permute.xlu0 0
        %773 = vperm.xlu0 %772, %v751
        %v774 = vpop.permute.xlu0 %773
        %777 = vset.pattern.permute.xlu0 0
        %778 = vperm.xlu0 %777, %v752
        %v779 = vpop.permute.xlu0 %778
        %782 = vset.pattern.permute.xlu0 0
        %783 = vperm.xlu0 %782, %v753
        %v784 = vpop.permute.xlu0 %783
        %787 = vset.pattern.permute.xlu0 0
        %788 = vperm.xlu0 %787, %v754
        %v789 = vpop.permute.xlu0 %788
        %792 = vset.pattern.permute.xlu0 0
        %793 = vperm.xlu0 %792, %v755
        %v794 = vpop.permute.xlu0 %793
        %v804 = vunpack.c.l.b16 %v724
        %v805 = vunpack.c.l.b16 %v725
        %v806 = vunpack.c.l.b16 %v726
        %v807 = vunpack.c.l.b16 %v727
        %v808 = vunpack.c.l.b16 %v728
        %v809 = vunpack.c.l.b16 %v729
        %v810 = vunpack.c.l.b16 %v730
        %v811 = vunpack.c.l.b16 %v731
        %v812 = vpack.c.b16 %v805, %v804
        %v813 = vpack.c.b16 %v807, %v806
        %v814 = vpack.c.b16 %v809, %v808
        %v815 = vpack.c.b16 %v811, %v810
        %820 = vmatprep.subr.bf16.mxu0 %v733
        %821 = vmatpush1.bf16.msra.mxu0 %v732
        %822 = vmatprep.subr.bf16.mxu0 %v735
        %823 = vmatpush1.bf16.msra.mxu0 %v734
        %824 = vmatprep.subr.bf16.mxu0 %v737
        %825 = vmatpush1.bf16.msra.mxu0 %v736
        %826 = vmatprep.subr.bf16.mxu0 %v739
        %827 = vmatpush1.bf16.msra.mxu0 %v738
        %828 = vmatprep.subr.bf16.mxu0 %v741
        %829 = vmatpush1.bf16.msra.mxu0 %v740
        %830 = vmatprep.subr.bf16.mxu0 %v743
        %831 = vmatpush1.bf16.msra.mxu0 %v742
        %832 = vmatprep.subr.bf16.mxu0 %v745
        %833 = vmatpush1.bf16.msra.mxu0 %v744
        %834 = vmatprep.subr.bf16.mxu0 %v747
        %835 = vmatpush1.bf16.msra.mxu0 %v746
        %836 = vmatprep.subr.bf16.mxu0 0
        %837 = vmatpush1.bf16.msra.mxu0 0
        %838 = vmatprep.subr.bf16.mxu0 0
        %839 = vmatpush1.bf16.msra.mxu0 0
        %840 = vmatprep.subr.bf16.mxu0 0
        %841 = vmatpush1.bf16.msra.mxu0 0
        %842 = vmatprep.subr.bf16.mxu0 0
        %843 = vmatpush1.bf16.msra.mxu0 0
        %844 = vmatprep.subr.bf16.mxu0 0
        %845 = vmatpush1.bf16.msra.mxu0 0
        %846 = vmatprep.subr.bf16.mxu0 0
        %847 = vmatpush1.bf16.msra.mxu0 0
        %848 = vmatprep.subr.bf16.mxu0 0
        %849 = vmatpush1.bf16.msra.mxu0 0
        %850 = vmatprep.subr.bf16.mxu0 0
        %851 = vmatpush1.bf16.msra.mxu0 0
        %852 = vmatprep.mubr.bf16.mxu0 0
        %853 = vmatmul.mubr.bf16.gmra.mrb[0].mxu0 %v812
        %v854 = vpop.f32.mrb[0].mxu0
        %v855 = vadd.f32 %v759, %v854
        %v856 = vpop.f32.mrb[0].mxu0
        %v857 = vadd.f32 %v759, %v856
        %v858 = vpop.f32.mrb[0].mxu0
        %v859 = vadd.f32 %v764, %v858
        %v860 = vpop.f32.mrb[0].mxu0
        %v861 = vadd.f32 %v764, %v860
        %862 = vmatprep.mubr.bf16.mxu0 0
        %863 = vmatmul.mubr.bf16.gmra.mrb[0].mxu0 %v813
        %v864 = vpop.f32.mrb[0].mxu0
        %v865 = vadd.f32 %v769, %v864
        %v866 = vpop.f32.mrb[0].mxu0
        %v867 = vadd.f32 %v769, %v866
        %v868 = vpop.f32.mrb[0].mxu0
        %v869 = vadd.f32 %v774, %v868
        %v870 = vpop.f32.mrb[0].mxu0
        %v871 = vadd.f32 %v774, %v870
        %872 = vmatprep.mubr.bf16.mxu0 0
        %873 = vmatmul.mubr.bf16.gmra.mrb[0].mxu0 %v814
        %v874 = vpop.f32.mrb[0].mxu0
        %v875 = vadd.f32 %v779, %v874
        %v876 = vpop.f32.mrb[0].mxu0
        %v877 = vadd.f32 %v779, %v876
        %v878 = vpop.f32.mrb[0].mxu0
        %v879 = vadd.f32 %v784, %v878
        %v880 = vpop.f32.mrb[0].mxu0
        %v881 = vadd.f32 %v784, %v880
        %882 = vmatprep.mubr.bf16.mxu0 0
        %883 = vmatmul.mubr.bf16.gmra.mrb[0].mxu0 %v815
        %v884 = vpop.f32.mrb[0].mxu0
        %v885 = vadd.f32 %v789, %v884
        %v886 = vpop.f32.mrb[0].mxu0
        %v887 = vadd.f32 %v789, %v886
        %v888 = vpop.f32.mrb[0].mxu0
        %v889 = vadd.f32 %v794, %v888
        %v890 = vpop.f32.mrb[0].mxu0
        %v891 = vadd.f32 %v794, %v890
        %892 = vdwg.mxu0
        %v893 = vmax.f32 %v855, 0.0
        %v894 = vmax.f32 %v857, 0.0
        %v895 = vmax.f32 %v859, 0.0
        %v896 = vmax.f32 %v861, 0.0
        %v897 = vmax.f32 %v865, 0.0
        %v898 = vmax.f32 %v867, 0.0
        %v899 = vmax.f32 %v869, 0.0
        %v900 = vmax.f32 %v871, 0.0
        %v901 = vmax.f32 %v875, 0.0
        %v902 = vmax.f32 %v877, 0.0
        %v903 = vmax.f32 %v879, 0.0
        %v904 = vmax.f32 %v881, 0.0
        %v905 = vmax.f32 %v885, 0.0
        %v906 = vmax.f32 %v887, 0.0
        %v907 = vmax.f32 %v889, 0.0
        %v908 = vmax.f32 %v891, 0.0
        %v909 = vld [vmem:[%s5] sm:$0xff]
        %v910 = vld [vmem:[%s5 + $0x8] sm:$0xff]
        %v911 = vld [vmem:[%s5 + $0x10] sm:$0xff]
        %v912 = vld [vmem:[%s5 + $0x18] sm:$0xff]
        %v913 = vld [vmem:[%s5 + $0x20] sm:$0xff]
        %v914 = vld [vmem:[%s5 + $0x28] sm:$0xff]
        %v915 = vld [vmem:[%s5 + $0x30] sm:$0xff]
        %v916 = vld [vmem:[%s5 + $0x38] sm:$0xff]
        %918 = vset.pattern.permute.xlu0 0
        %919 = vperm.xlu0 %918, %v909
        %v920 = vpop.permute.xlu0 %919
        %923 = vset.pattern.permute.xlu0 0
        %924 = vperm.xlu0 %923, %v910
        %v925 = vpop.permute.xlu0 %924
        %928 = vset.pattern.permute.xlu0 0
        %929 = vperm.xlu0 %928, %v911
        %v930 = vpop.permute.xlu0 %929
        %933 = vset.pattern.permute.xlu0 0
        %934 = vperm.xlu0 %933, %v912
        %v935 = vpop.permute.xlu0 %934
        %938 = vset.pattern.permute.xlu0 0
        %939 = vperm.xlu0 %938, %v913
        %v940 = vpop.permute.xlu0 %939
        %943 = vset.pattern.permute.xlu0 0
        %944 = vperm.xlu0 %943, %v914
        %v945 = vpop.permute.xlu0 %944
        %948 = vset.pattern.permute.xlu0 0
        %949 = vperm.xlu0 %948, %v915
        %v950 = vpop.permute.xlu0 %949
        %953 = vset.pattern.permute.xlu0 0
        %954 = vperm.xlu0 %953, %v916
        %v955 = vpop.permute.xlu0 %954
        %v957 = vmul.f32 %v893, %v920
        %v958 = vmul.f32 %v894, %v920
        %v959 = vmul.f32 %v895, %v925
        %v960 = vmul.f32 %v896, %v925
        %v961 = vmul.f32 %v897, %v930
        %v962 = vmul.f32 %v898, %v930
        %v963 = vmul.f32 %v899, %v935
        %v964 = vmul.f32 %v900, %v935
        %v965 = vmul.f32 %v901, %v940
        %v966 = vmul.f32 %v902, %v940
        %v967 = vmul.f32 %v903, %v945
        %v968 = vmul.f32 %v904, %v945
        %v969 = vmul.f32 %v905, %v950
        %v970 = vmul.f32 %v906, %v950
        %v971 = vmul.f32 %v907, %v955
        %v972 = vmul.f32 %v908, %v955
        %v973 = vadd.f32 %v957, %v959
        %v974 = vadd.f32 %v973, %v961
        %v975 = vadd.f32 %v974, %v963
        %v976 = vadd.f32 %v975, %v965
        %v977 = vadd.f32 %v976, %v967
        %v978 = vadd.f32 %v977, %v969
        %v979 = vadd.f32 %v978, %v971
        %v980 = vrot.slane %v979, 4
        %v981 = vadd.f32 %v979, %v980
        %v982 = vrot.slane %v981, 2
        %v983 = vadd.f32 %v981, %v982
        %v984 = vrot.slane %v983, 1
        %v985 = vadd.f32 %v983, %v984
        %v986 = vadd.f32 %v958, %v960
        %v987 = vadd.f32 %v986, %v962
        %v988 = vadd.f32 %v987, %v964
        %v989 = vadd.f32 %v988, %v966
        %v990 = vadd.f32 %v989, %v968
        %v991 = vadd.f32 %v990, %v970
        %v992 = vadd.f32 %v991, %v972
        %v993 = vrot.slane %v992, 4
        %v994 = vadd.f32 %v992, %v993
        %v995 = vrot.slane %v994, 2
        %v996 = vadd.f32 %v994, %v995
        %v997 = vrot.slane %v996, 1
        %v998 = vadd.f32 %v996, %v997
        %s999 = sld [smem:[#allocation2]]
        %v1000 = vstv %s999
        %v1001 = vadd.f32 %v985, %v1000
        %v1002 = vadd.f32 %v998, %v1000
        %v1005 = vcombine.low %v1001, %v1002
        %v1007 = vunpack.c.l.s4 1966171168
        %v1008 = vunpack.c.0.s8 %v1007
        %v1009 = vlaneseq
        %v1010 = vshrl.u32 %v1009, 7
        %v1011 = vsub.s32 %v1008, %v1010
        %v1012 = vrot.slane %v1005, %v1011
        %v1014 = vunpack.c.l.s4 1966171168
        %v1015 = vunpack.c.0.s8 %v1014
        %v1016 = vlaneseq
        %v1017 = vshrl.u32 %v1016, 7
        %v1018 = vsub.s32 %v1015, %v1017
        %v1019 = vrot.slane %v1012, %v1018
        %v1021 = vlaneseq
        %vm1022 = vcmp.ge.s32.totalorder %v1021, 0
        %vm1023 = vcmp.lt.s32.totalorder %v1021, 256
        %vm1024 = vmand %vm1022, %vm1023
        %1025 = vst.msk [vmem:[%s285] sm:$0x3] %vm1024, %v1019
        %s1026 = sand.u32 %s182, 1
        %s1027 = scalar_lea.sflag [#allocation4], %s1026
        %s1028 = sand.u32 %s182, 1
        %s1029 = smul.addr %s1028, 2
        %s1030 = scalar_lea.vmem [#allocation3], %s1029
        // Predicated region
        $region49: #{mlp_forward.1} parent=47 // pred_check
          %p1031 = pneg %p192
        $region50: #{mlp_forward.1} parent=47 // pred_check_branch
          %1033 = sbr.rel (%p1031) target = $region52
        $region51: #{mlp_forward.1} parent=47 // pred_region
          %s1034 = smul.u32 2, %s22
          %s1035 = ssub.s32 3, %s1034
          %p1036 = scmp.lt.s32.totalorder %s1035, 2
          %s1037 = scalar_select %p1036, %s1035, 2
          %s1038 = smul.u32 16, %s1037
          %s1040 = ssub.s32 32, %s1038
          %1041 = vsyncadd %s1027, %s1040
          %p1042 = scmp.ne.s32.totalorder 0, %s1038
          %s1043 = smul.addr %s1034, 16
          %s1044 = scalar_lea.hbm %s7, %s1043
          %s1045 = sshll.u32 %s1037, 4
          %s1046 = sshll.u32 %s1030, 4
          %s1047 = int_to_ptr.vmem [resolvable:$true] %s1046
          %1049 = dma.vmem_to_hbm [thread:$0]  (%p1042), %s1047, %s1045, %s1044, %s1027
        $region52: #{mlp_forward.1} parent=47 // pred_fallthru
          _
      $region48: #{mlp_forward.1} parent=5 // pred_fallthru
        _
      %p1050 = scmp.le.s32.totalorder 2, %s17
      // Predicated region
      $region53: #{mlp_forward.1} parent=5 // pred_check
        %p1051 = pneg %p1050
      $region54: #{mlp_forward.1} parent=5 // pred_check_branch
        %1053 = sbr.rel (%p1051) target = $region56
      $region55: #{mlp_forward.1} parent=5 // pred_region
        %s1054 = ssub.s32 %s17, 2
        // Predicated region
        $region57: #{mlp_forward.1} parent=55 // pred_check
          %p1055 = pneg %p198
        $region58: #{mlp_forward.1} parent=55 // pred_check_branch
          %1057 = sbr.rel (%p1055) target = $region60
        $region59: #{mlp_forward.1} parent=55 // pred_region
          %s1058 = sand.u32 %s183, 1
          %s1059 = scalar_lea.sflag [#allocation4], %s1058
          %s1060 = sand.u32 %s183, 1
          %s1061 = smul.addr %s1060, 2
          %s1062 = scalar_lea.vmem [#allocation3], %s1061
          %1063 = dma.done %s1059, 32
        $region60: #{mlp_forward.1} parent=55 // pred_fallthru
          _
      $region56: #{mlp_forward.1} parent=5 // pred_fallthru
        _
    $region6: #{mlp_forward.1} parent=1 // loop_footer
      %s21 = sadd.s32 1, %s17
    $region7: #{mlp_forward.1} parent=1 // loop_footer_branch
      %16 = sbr.rel target = $region3
    $region8: #{mlp_forward.1} parent=1 // loop_exit
      _
    %1064 = vsyncpa [#allocation4], 1
    %s1065 = scalar_lea.sflag [#allocation4], 1
    %1066 = vsyncpa %s1065, 1

</llo_original>
